<compile_context>
chip_gen: v6e
topology: v6e:2x2x1
jax: 0.10.0
libtpu: 0.0.40
codegen_flags: <defaults>
</compile_context>

<pallas_src>
import functools

import jax
import jax.numpy as jnp
from jax.experimental import pallas as pl
from jax.experimental.pallas import tpu as pltpu


# ----------------------------------------------------------------------------
# Kernel
# ----------------------------------------------------------------------------
def _residual_block_kernel(x_ref, w1_ref, b1_ref, w2_ref, b2_ref, w3_ref,
                           b3_ref, o_ref, h1buf, *, dilation: int,
                           kernel_size: int, pad: int, halo: int,
                           b_tile: int, mm_dtype):
    """One (batch-block, T-tile) grid step.

    x block = (B_tile, C_in, T_tile): channels on sublanes, time on lanes
    (lane-dense loads/stores, no in-kernel transposes).  Weights are tiny and
    fully VMEM-resident.  h1buf carries the causal halo (last `pad` columns of
    h1) across T tiles of the same batch block; conv1 writes h1 directly into
    h1buf[:, :, halo:] so no halo-extended copy is materialized.
    """
    ti = pl.program_id(1)
    T = x_ref.shape[2]
    C_r = w1_ref.shape[0]

    # Load the (small) weights once per grid step.
    w1 = w1_ref[...]
    w2 = [w2_ref[j] for j in range(kernel_size)]
    w3 = w3_ref[...]
    b1 = b1_ref[...]
    b2 = b2_ref[...]
    b3 = b3_ref[...]

    if pad > 0:
        # First T tile of each batch block: zero the causal halo (this is
        # exactly Conv1d's zero padding of its *input*, h1).
        @pl.when(ti == 0)
        def _():
            h1buf[:, :, :halo] = jnp.zeros((b_tile, C_r, halo), jnp.float32)

    for b in range(b_tile):            # unrolled; b_tile is small and static
        x = x_ref[b]                                     # (C_in, T)

        # ---- conv1 (1x1) + ReLU: MXU (C_r, C_in) @ (C_in, T) ----
        h1 = jnp.dot(w1, x.astype(mm_dtype),
                     preferred_element_type=jnp.float32)
        h1 = jnp.maximum(h1 + b1, 0.0)                   # (C_r, T) f32
        # dropout 1: identity (eval)

        # ---- conv2: causal dilated conv = K accumulating MXU matmuls over
        #      lane-shifted slices of the halo-extended h1 scratch ----
        if pad > 0:
            h1buf[b, :, halo:] = h1                      # lane-aligned store
            h2 = None
            for j in range(kernel_size):
                s = halo - pad + j * dilation            # static lane offset
                tap = h1buf[b, :, s:s + T].astype(mm_dtype)
                y = jnp.dot(w2[j], tap, preferred_element_type=jnp.float32)
                h2 = y if h2 is None else h2 + y
            # Carry the causal halo (last `pad` h1 columns) to the next T tile.
            # NOTE: must stay after the tap reads above.
            h1buf[b, :, halo - pad:halo] = h1[:, T - pad:]
        else:                                            # kernel_size == 1
            h2 = jnp.dot(w2[0], h1.astype(mm_dtype),
                         preferred_element_type=jnp.float32)
        h2 = jnp.maximum(h2 + b2, 0.0)                   # (C_r, T)
        # dropout 2: identity (eval)

        # ---- conv3 (1x1) + residual add + ReLU; lane-dense store ----
        h3 = jnp.dot(w3, h2.astype(mm_dtype),
                     preferred_element_type=jnp.float32)
        h3 = h3 + b3                                     # (C_in, T)
        o_ref[b] = jnp.maximum(x.astype(jnp.float32) + h3,
                               0.0).astype(o_ref.dtype)


# ----------------------------------------------------------------------------
# Wrapper helpers
# ----------------------------------------------------------------------------
def _round_up(v: int, m: int) -> int:
    return ((v + m - 1) // m) * m


def _vmem_limit_bytes() -> int:
    """Generation-aware VMEM cap: ~96 MiB on v5e/v6e (128 MiB), <=48 MiB on v7x."""
    try:
        cap = int(pltpu.get_tpu_info().vmem_capacity_bytes)
    except Exception:
        cap = 64 * 1024 * 1024
    return int(min(100 * 1024 * 1024, (cap * 3) // 4))


def _choose_tiles(B, C_in, C_r, K, pad, T, io_itemsize, vmem_limit, t_tile_max):
    """Pick (b_tile, t_tile, halo) maximizing bytes/grid-step within VMEM budget."""
    T128 = _round_up(T, 128)
    halo = _round_up(pad, 128) if pad > 0 else 0
    budget = int(vmem_limit * 0.8)
    weight_bytes = ((C_r * C_in + K * C_r * C_r + C_in * C_r) * 2 * 2
                    + (2 * C_r + C_in) * 4 * 2 + (1 << 16))

    def step_bytes(b_t, t_t):
        xin = 2 * b_t * C_in * t_t * io_itemsize         # double-buffered x
        out = 2 * b_t * C_in * t_t * io_itemsize         # double-buffered out
        scratch = b_t * C_r * (halo + t_t) * 4 if pad > 0 else 0
        temps = (3 * C_r + 2 * C_in) * t_t * 4           # h1/h2/tap + x/h3 live
        return xin + out + scratch + temps + weight_bytes

    t_cap = min(T128, _round_up(max(t_tile_max, 128), 128))
    t_min = max(128, _round_up(max(pad, 1), 128))
    t_tile = max(t_cap, t_min)
    while t_tile > t_min and step_bytes(1, t_tile) > budget:
        t_tile -= 128

    # Fold batch rows, keeping >=2 "parallel" grid steps when B >= 2 (megacore).
    b_cap = min(8, B if B < 2 else max(1, B // 2))
    b_tile = 1
    for cand in range(b_cap, 0, -1):
        if B % cand == 0 and step_bytes(cand, t_tile) <= budget:
            b_tile = cand
            break
    return b_tile, t_tile, halo


def prepare_residual_block_params(w1, b1, w2, b2, w3, b3, *,
                                  mm_dtype=jnp.bfloat16):
    """One-time weight layout (hoisted out of the hot path):
    conv2 planes stacked to (K, C_r, C_r), matmul operands in mm_dtype
    (f32 accumulation in-kernel), biases as f32 (C, 1) columns.
    Weight conventions: w1 (C_r, C_in), w2 (C_r, C_r, K), w3 (C_in, C_r)."""
    C_r, C_in = w1.shape
    return dict(
        w1=jnp.asarray(w1, mm_dtype),
        b1=jnp.asarray(b1, jnp.float32).reshape(C_r, 1),
        w2=jnp.transpose(jnp.asarray(w2, mm_dtype), (2, 0, 1)),  # (K, C_r, C_r)
        b2=jnp.asarray(b2, jnp.float32).reshape(C_r, 1),
        w3=jnp.asarray(w3, mm_dtype),
        b3=jnp.asarray(b3, jnp.float32).reshape(C_in, 1),
    )


def residual_block(x_bct, params, *, dilation: int, t_tile_max: int = 8192,
                   io_dtype=None, vmem_limit_bytes=None):
    """x_bct: (B, C_in, T) in PyTorch Conv1d layout. Returns (B, C_in, T)."""
    x_io = x_bct if io_dtype is None else x_bct.astype(io_dtype)
    B, C_in, T = x_io.shape
    C_r = params["w1"].shape[0]
    K = params["w2"].shape[0]
    pad = dilation * (K - 1)
    mm_dtype = params["w1"].dtype

    if vmem_limit_bytes is None:
        vmem_limit_bytes = _vmem_limit_bytes()

    b_tile, t_tile, halo = _choose_tiles(
        B, C_in, C_r, K, pad, T, jnp.dtype(x_io.dtype).itemsize,
        vmem_limit_bytes, t_tile_max)
    if pad > t_tile:
        raise ValueError("dilation*(kernel_size-1) must be <= the T tile size")

    n_t = -(-T // t_tile)                              # ceil
    T_pad = n_t * t_tile
    n_b = B // b_tile

    # Right-pad time with zeros (causal conv -> padded columns never feed the
    # real outputs; they are sliced off below).
    x_p = x_io if T_pad == T else jnp.pad(x_io, ((0, 0), (0, 0), (0, T_pad - T)))

    kernel = functools.partial(
        _residual_block_kernel, dilation=dilation, kernel_size=K, pad=pad,
        halo=halo, b_tile=b_tile, mm_dtype=mm_dtype)

    scratch = (pltpu.VMEM((b_tile, C_r, halo + t_tile), jnp.float32)
               if pad > 0 else pltpu.VMEM((1, 8, 128), jnp.float32))

    out = pl.pallas_call(
        kernel,
        out_shape=jax.ShapeDtypeStruct((B, C_in, T_pad), x_io.dtype),
        grid_spec=pltpu.PrefetchScalarGridSpec(
            num_scalar_prefetch=0,
            grid=(n_b, n_t),                           # T-tile axis innermost
            in_specs=[
                pl.BlockSpec((b_tile, C_in, t_tile), lambda b, t: (b, 0, t)),
                pl.BlockSpec((C_r, C_in), lambda b, t: (0, 0)),
                pl.BlockSpec((C_r, 1), lambda b, t: (0, 0)),
                pl.BlockSpec((K, C_r, C_r), lambda b, t: (0, 0, 0)),
                pl.BlockSpec((C_r, 1), lambda b, t: (0, 0)),
                pl.BlockSpec((C_in, C_r), lambda b, t: (0, 0)),
                pl.BlockSpec((C_in, 1), lambda b, t: (0, 0)),
            ],
            out_specs=pl.BlockSpec((b_tile, C_in, t_tile),
                                   lambda b, t: (b, 0, t)),
            scratch_shapes=[scratch],
        ),
        compiler_params=pltpu.CompilerParams(
            # Batch-block axis shards across TensorCores; T must stay
            # sequential ("arbitrary") -- the causal halo is carried in scratch
            # across T tiles.  Do NOT mark the T axis parallel.
            dimension_semantics=("parallel", "arbitrary"),
            vmem_limit_bytes=int(vmem_limit_bytes),
        ),
    )(x_p, params["w1"], params["b1"], params["w2"], params["b2"],
      params["w3"], params["b3"])

    return out if T_pad == T else out[:, :, :T]


# ----------------------------------------------------------------------------
# Pure-JAX reference (mirrors the PyTorch forward, eval mode, (B, C, T))
# ----------------------------------------------------------------------------
def _reference(x_bct, w1, b1, w2, b2, w3, b3, *, dilation: int):
    K = w2.shape[2]
    pad = dilation * (K - 1)
    T = x_bct.shape[2]
    h1 = jax.nn.relu(jnp.einsum("oc,bct->bot", w1, x_bct) + b1[None, :, None])
    h1p = jnp.pad(h1, ((0, 0), (0, 0), (pad, 0)))
    acc = 0.0
    for j in range(K):
        acc = acc + jnp.einsum("oc,bct->bot", w2[:, :, j],
                               h1p[:, :, j * dilation:j * dilation + T])
    h2 = jax.nn.relu(acc + b2[None, :, None])
    h3 = jnp.einsum("oc,bct->bot", w3, h2) + b3[None, :, None]
    return jax.nn.relu(x_bct + h3)


if __name__ == "__main__":
    # Small, forward-consistent shapes (PyTorch defaults scaled down).
    B, C_IN, C_RES, T = 2, 32, 16, 16
    DILATION, KSIZE = 2, 3

    key = jax.random.PRNGKey(0)
    ks = jax.random.split(key, 8)
    x = jax.random.normal(ks[0], (B, C_IN, T), jnp.float32)
    w1 = jax.random.normal(ks[1], (C_RES, C_IN), jnp.float32) * 0.1
    b1 = jax.random.normal(ks[2], (C_RES,), jnp.float32) * 0.1
    w2 = jax.random.normal(ks[3], (C_RES, C_RES, KSIZE), jnp.float32) * 0.1
    b2 = jax.random.normal(ks[4], (C_RES,), jnp.float32) * 0.1
    w3 = jax.random.normal(ks[5], (C_IN, C_RES), jnp.float32) * 0.1
    b3 = jax.random.normal(ks[6], (C_IN,), jnp.float32) * 0.1

    # One-time weight layout (hoisted out of the per-call hot path).
    params = prepare_residual_block_params(w1, b1, w2, b2, w3, b3)

    # Single-T-tile case (whole sequence fits one 128-lane tile).
    fwd = jax.jit(functools.partial(residual_block, dilation=DILATION))
    out = jax.block_until_ready(fwd(x, params))
    ref = _reference(x, w1, b1, w2, b2, w3, b3, dilation=DILATION)
    assert out.shape == (B, C_IN, T)
    # bf16 matmul operands (f32 accumulation) -> loosened tolerance.
    assert jnp.allclose(out, ref, atol=2e-2, rtol=2e-2), \
        "mismatch vs reference (single tile)"

    # Multi-T-tile case: exercises the causal-halo carry across T tiles.
    T2 = 300
    x2 = jax.random.normal(ks[7], (B, C_IN, T2), jnp.float32)
    fwd2 = jax.jit(functools.partial(residual_block, dilation=DILATION,
                                     t_tile_max=128))
    out2 = jax.block_until_ready(fwd2(x2, params))
    ref2 = _reference(x2, w1, b1, w2, b2, w3, b3, dilation=DILATION)
    assert out2.shape == (B, C_IN, T2)
    assert jnp.allclose(out2, ref2, atol=2e-2, rtol=2e-2), \
        "mismatch vs reference (multi tile)"

    print("KERNEL_OK")
</pallas_src>

<mosaic_0001>
module attributes {stable_mosaic.version = 11 : i64} {
  func.func @_residual_block_kernel(%arg0: i32, %arg1: i32, %arg2: memref<1x32x128xf32, #tpu.memory_space<vmem>>, %arg3: memref<16x32xbf16, #tpu.memory_space<vmem>>, %arg4: memref<16x1xf32, #tpu.memory_space<vmem>>, %arg5: memref<3x16x16xbf16, #tpu.memory_space<vmem>>, %arg6: memref<16x1xf32, #tpu.memory_space<vmem>>, %arg7: memref<32x16xbf16, #tpu.memory_space<vmem>>, %arg8: memref<32x1xf32, #tpu.memory_space<vmem>>, %arg9: memref<1x32x128xf32, #tpu.memory_space<vmem>>, %arg10: memref<1x16x256xf32, #tpu.memory_space<vmem>>) attributes {dimension_semantics = [#tpu.dimension_semantics<parallel>, #tpu.dimension_semantics<arbitrary>], iteration_bounds = array<i64: 2, 1>, scalar_prefetch = 0 : i64, scratch_operands = 1 : i64, tpu.core_type = #tpu.core_type<tc>, window_params = [{transform_indices = @transform_0, window_bounds = array<i64: 1, 32, 128>}, {pipeline_mode = #tpu.pipeline_mode<synchronous>, transform_indices = @transform_1, window_bounds = array<i64: 16, 32>}, {pipeline_mode = #tpu.pipeline_mode<synchronous>, transform_indices = @transform_2, window_bounds = array<i64: 16, 1>}, {pipeline_mode = #tpu.pipeline_mode<synchronous>, transform_indices = @transform_3, window_bounds = array<i64: 3, 16, 16>}, {pipeline_mode = #tpu.pipeline_mode<synchronous>, transform_indices = @transform_4, window_bounds = array<i64: 16, 1>}, {pipeline_mode = #tpu.pipeline_mode<synchronous>, transform_indices = @transform_5, window_bounds = array<i64: 32, 16>}, {pipeline_mode = #tpu.pipeline_mode<synchronous>, transform_indices = @transform_6, window_bounds = array<i64: 32, 1>}, {transform_indices = @transform_7, window_bounds = array<i64: 1, 32, 128>}]} {
    %c0 = arith.constant 0 : index
    %c0_0 = arith.constant 0 : index
    %0 = vector.load %arg3[%c0, %c0_0] : memref<16x32xbf16, #tpu.memory_space<vmem>>, vector<16x32xbf16>
    %c0_1 = arith.constant 0 : index
    %c0_2 = arith.constant 0 : index
    %c0_3 = arith.constant 0 : index
    %1 = vector.load %arg5[%c0_1, %c0_2, %c0_3] : memref<3x16x16xbf16, #tpu.memory_space<vmem>>, vector<1x16x16xbf16>
    %2 = vector.shape_cast %1 : vector<1x16x16xbf16> to vector<16x16xbf16>
    %c1 = arith.constant 1 : index
    %c0_4 = arith.constant 0 : index
    %c0_5 = arith.constant 0 : index
    %3 = vector.load %arg5[%c1, %c0_4, %c0_5] : memref<3x16x16xbf16, #tpu.memory_space<vmem>>, vector<1x16x16xbf16>
    %4 = vector.shape_cast %3 : vector<1x16x16xbf16> to vector<16x16xbf16>
    %c2 = arith.constant 2 : index
    %c0_6 = arith.constant 0 : index
    %c0_7 = arith.constant 0 : index
    %5 = vector.load %arg5[%c2, %c0_6, %c0_7] : memref<3x16x16xbf16, #tpu.memory_space<vmem>>, vector<1x16x16xbf16>
    %6 = vector.shape_cast %5 : vector<1x16x16xbf16> to vector<16x16xbf16>
    %c0_8 = arith.constant 0 : index
    %c0_9 = arith.constant 0 : index
    %7 = vector.load %arg7[%c0_8, %c0_9] : memref<32x16xbf16, #tpu.memory_space<vmem>>, vector<32x16xbf16>
    %c0_10 = arith.constant 0 : index
    %c0_11 = arith.constant 0 : index
    %8 = vector.load %arg4[%c0_10, %c0_11] : memref<16x1xf32, #tpu.memory_space<vmem>>, vector<16x1xf32>
    %c0_12 = arith.constant 0 : index
    %c0_13 = arith.constant 0 : index
    %9 = vector.load %arg6[%c0_12, %c0_13] : memref<16x1xf32, #tpu.memory_space<vmem>>, vector<16x1xf32>
    %c0_14 = arith.constant 0 : index
    %c0_15 = arith.constant 0 : index
    %10 = vector.load %arg8[%c0_14, %c0_15] : memref<32x1xf32, #tpu.memory_space<vmem>>, vector<32x1xf32>
    %c0_i32 = arith.constant 0 : i32
    %11 = arith.cmpi eq, %arg1, %c0_i32 : i32
    %12 = arith.extui %11 : i1 to i32
    %c0_i32_16 = arith.constant 0 : i32
    %13 = arith.cmpi ne, %12, %c0_i32_16 : i32
    scf.if %13 {
      %cst_42 = arith.constant 0.000000e+00 : f32
      %57 = vector.broadcast %cst_42 : f32 to vector<1x16x128xf32>
      %c0_43 = arith.constant 0 : index
      %c0_44 = arith.constant 0 : index
      %c0_45 = arith.constant 0 : index
      %58 = vector.load %arg10[%c0_43, %c0_44, %c0_45] : memref<1x16x256xf32, #tpu.memory_space<vmem>>, vector<1x16x128xf32>
      tpu.vector_store %arg10[%c0_43, %c0_44, %c0_45], %57 {strides = array<i32>} : memref<1x16x256xf32, #tpu.memory_space<vmem>>, vector<1x16x128xf32>,
    } else {
    }
    %c0_17 = arith.constant 0 : index
    %c0_18 = arith.constant 0 : index
    %c0_19 = arith.constant 0 : index
    %14 = vector.load %arg2[%c0_17, %c0_18, %c0_19] : memref<1x32x128xf32, #tpu.memory_space<vmem>>, vector<1x32x128xf32>
    %15 = vector.shape_cast %14 : vector<1x32x128xf32> to vector<32x128xf32>
    %16 = arith.truncf %15 : vector<32x128xf32> to vector<32x128xbf16>
    %cst = arith.constant dense<0.000000e+00> : vector<16x128xf32>
    %17 = tpu.matmul %0, %16, %cst {dimension_numbers = #tpu.dot_dimension_numbers<[1], [0], [0], [1], [0, 0, 1, 1], [], []>} : vector<16x32xbf16>, vector<32x128xbf16>, vector<16x128xf32> -> vector<16x128xf32>
    %18 = vector.broadcast %8 : vector<16x1xf32> to vector<16x128xf32>
    %19 = arith.addf %17, %18 : vector<16x128xf32>
    %cst_20 = arith.constant 0.000000e+00 : f32
    %20 = vector.broadcast %cst_20 : f32 to vector<16x128xf32>
    %21 = arith.maximumf %19, %20 : vector<16x128xf32>
    %c0_21 = arith.constant 0 : index
    %c0_22 = arith.constant 0 : index
    %c128 = arith.constant 128 : index
    %22 = vector.load %arg10[%c0_21, %c0_22, %c128] : memref<1x16x256xf32, #tpu.memory_space<vmem>>, vector<1x16x128xf32>
    %23 = vector.shape_cast %22 : vector<1x16x128xf32> to vector<16x128xf32>
    %24 = vector.shape_cast %21 : vector<16x128xf32> to vector<1x16x128xf32>
    tpu.vector_store %arg10[%c0_21, %c0_22, %c128], %24 {strides = array<i32>} : memref<1x16x256xf32, #tpu.memory_space<vmem>>, vector<1x16x128xf32>,
    %c0_23 = arith.constant 0 : index
    %c0_24 = arith.constant 0 : index
    %c124 = arith.constant 124 : index
    %25 = vector.load %arg10[%c0_23, %c0_24, %c124] : memref<1x16x256xf32, #tpu.memory_space<vmem>>, vector<1x16x128xf32>
    %26 = vector.shape_cast %25 : vector<1x16x128xf32> to vector<16x128xf32>
    %27 = arith.truncf %26 : vector<16x128xf32> to vector<16x128xbf16>
    %cst_25 = arith.constant dense<0.000000e+00> : vector<16x128xf32>
    %28 = tpu.matmul %2, %27, %cst_25 {dimension_numbers = #tpu.dot_dimension_numbers<[1], [0], [0], [1], [0, 0, 1, 1], [], []>} : vector<16x16xbf16>, vector<16x128xbf16>, vector<16x128xf32> -> vector<16x128xf32>
    %c0_26 = arith.constant 0 : index
    %c0_27 = arith.constant 0 : index
    %c126 = arith.constant 126 : index
    %29 = vector.load %arg10[%c0_26, %c0_27, %c126] : memref<1x16x256xf32, #tpu.memory_space<vmem>>, vector<1x16x128xf32>
    %30 = vector.shape_cast %29 : vector<1x16x128xf32> to vector<16x128xf32>
    %31 = arith.truncf %30 : vector<16x128xf32> to vector<16x128xbf16>
    %cst_28 = arith.constant dense<0.000000e+00> : vector<16x128xf32>
    %32 = tpu.matmul %4, %31, %cst_28 {dimension_numbers = #tpu.dot_dimension_numbers<[1], [0], [0], [1], [0, 0, 1, 1], [], []>} : vector<16x16xbf16>, vector<16x128xbf16>, vector<16x128xf32> -> vector<16x128xf32>
    %33 = arith.addf %28, %32 : vector<16x128xf32>
    %c0_29 = arith.constant 0 : index
    %c0_30 = arith.constant 0 : index
    %c128_31 = arith.constant 128 : index
    %34 = vector.load %arg10[%c0_29, %c0_30, %c128_31] : memref<1x16x256xf32, #tpu.memory_space<vmem>>, vector<1x16x128xf32>
    %35 = vector.shape_cast %34 : vector<1x16x128xf32> to vector<16x128xf32>
    %36 = arith.truncf %35 : vector<16x128xf32> to vector<16x128xbf16>
    %cst_32 = arith.constant dense<0.000000e+00> : vector<16x128xf32>
    %37 = tpu.matmul %6, %36, %cst_32 {dimension_numbers = #tpu.dot_dimension_numbers<[1], [0], [0], [1], [0, 0, 1, 1], [], []>} : vector<16x16xbf16>, vector<16x128xbf16>, vector<16x128xf32> -> vector<16x128xf32>
    %38 = arith.addf %33, %37 : vector<16x128xf32>
    %39 = vector.extract_strided_slice %21 {offsets = [0, 124], sizes = [16, 4], strides = [1, 1]} : vector<16x128xf32> to vector<16x4xf32>
    %c0_33 = arith.constant 0 : index
    %c0_34 = arith.constant 0 : index
    %c124_35 = arith.constant 124 : index
    %40 = vector.load %arg10[%c0_33, %c0_34, %c124_35] : memref<1x16x256xf32, #tpu.memory_space<vmem>>, vector<1x16x4xf32>
    %41 = vector.shape_cast %40 : vector<1x16x4xf32> to vector<16x4xf32>
    %42 = vector.shape_cast %39 : vector<16x4xf32> to vector<1x16x4xf32>
    tpu.vector_store %arg10[%c0_33, %c0_34, %c124_35], %42 {strides = array<i32>} : memref<1x16x256xf32, #tpu.memory_space<vmem>>, vector<1x16x4xf32>,
    %43 = vector.broadcast %9 : vector<16x1xf32> to vector<16x128xf32>
    %44 = arith.addf %38, %43 : vector<16x128xf32>
    %cst_36 = arith.constant 0.000000e+00 : f32
    %45 = vector.broadcast %cst_36 : f32 to vector<16x128xf32>
    %46 = arith.maximumf %44, %45 : vector<16x128xf32>
    %47 = arith.truncf %46 : vector<16x128xf32> to vector<16x128xbf16>
    %cst_37 = arith.constant dense<0.000000e+00> : vector<32x128xf32>
    %48 = tpu.matmul %7, %47, %cst_37 {dimension_numbers = #tpu.dot_dimension_numbers<[1], [0], [0], [1], [0, 0, 1, 1], [], []>} : vector<32x16xbf16>, vector<16x128xbf16>, vector<32x128xf32> -> vector<32x128xf32>
    %49 = vector.broadcast %10 : vector<32x1xf32> to vector<32x128xf32>
    %50 = arith.addf %48, %49 : vector<32x128xf32>
    %51 = arith.addf %15, %50 : vector<32x128xf32>
    %cst_38 = arith.constant 0.000000e+00 : f32
    %52 = vector.broadcast %cst_38 : f32 to vector<32x128xf32>
    %53 = arith.maximumf %51, %52 : vector<32x128xf32>
    %c0_39 = arith.constant 0 : index
    %c0_40 = arith.constant 0 : index
    %c0_41 = arith.constant 0 : index
    %54 = vector.load %arg9[%c0_39, %c0_40, %c0_41] : memref<1x32x128xf32, #tpu.memory_space<vmem>>, vector<1x32x128xf32>
    %55 = vector.shape_cast %54 : vector<1x32x128xf32> to vector<32x128xf32>
    %56 = vector.shape_cast %53 : vector<32x128xf32> to vector<1x32x128xf32>
    tpu.vector_store %arg9[%c0_39, %c0_40, %c0_41], %56 {strides = array<i32>} : memref<1x32x128xf32, #tpu.memory_space<vmem>>, vector<1x32x128xf32>,
    return
  }
  func.func @transform_0(%arg0: i32, %arg1: i32) -> (i32, i32, i32) {
    %c0_i32 = arith.constant 0 : i32
    %c0_i32_0 = arith.constant 0 : i32
    return %arg0, %c0_i32, %arg1 : i32, i32, i32
  }
  func.func @transform_1(%arg0: i32, %arg1: i32) -> (i32, i32) {
    %c0_i32 = arith.constant 0 : i32
    %c0_i32_0 = arith.constant 0 : i32
    %c0_i32_1 = arith.constant 0 : i32
    return %c0_i32, %c0_i32_0 : i32, i32
  }
  func.func @transform_2(%arg0: i32, %arg1: i32) -> (i32, i32) {
    %c0_i32 = arith.constant 0 : i32
    %c0_i32_0 = arith.constant 0 : i32
    %c0_i32_1 = arith.constant 0 : i32
    return %c0_i32, %c0_i32_0 : i32, i32
  }
  func.func @transform_3(%arg0: i32, %arg1: i32) -> (i32, i32, i32) {
    %c0_i32 = arith.constant 0 : i32
    %c0_i32_0 = arith.constant 0 : i32
    %c0_i32_1 = arith.constant 0 : i32
    %c0_i32_2 = arith.constant 0 : i32
    return %c0_i32, %c0_i32_0, %c0_i32_1 : i32, i32, i32
  }
  func.func @transform_4(%arg0: i32, %arg1: i32) -> (i32, i32) {
    %c0_i32 = arith.constant 0 : i32
    %c0_i32_0 = arith.constant 0 : i32
    %c0_i32_1 = arith.constant 0 : i32
    return %c0_i32, %c0_i32_0 : i32, i32
  }
  func.func @transform_5(%arg0: i32, %arg1: i32) -> (i32, i32) {
    %c0_i32 = arith.constant 0 : i32
    %c0_i32_0 = arith.constant 0 : i32
    %c0_i32_1 = arith.constant 0 : i32
    return %c0_i32, %c0_i32_0 : i32, i32
  }
  func.func @transform_6(%arg0: i32, %arg1: i32) -> (i32, i32) {
    %c0_i32 = arith.constant 0 : i32
    %c0_i32_0 = arith.constant 0 : i32
    %c0_i32_1 = arith.constant 0 : i32
    return %c0_i32, %c0_i32_0 : i32, i32
  }
  func.func @transform_7(%arg0: i32, %arg1: i32) -> (i32, i32, i32) {
    %c0_i32 = arith.constant 0 : i32
    %c0_i32_0 = arith.constant 0 : i32
    return %arg0, %c0_i32, %arg1 : i32, i32, i32
  }
}

</mosaic_0001>

<llo_original>
// kernel: residual_block.1
$region0: #{residual_block.1}
  #allocation0 [shape = 'u32[]', space=smem, size = 0x4, offset = 0x4, fixed_abs, tag = 'smem constant byte address 0x4 - core index']
  #allocation1 [shape = 'u32[144,128]{1,0:T(1,128)}', space=vmem, size = 0x12000, scoped, tag = 'internal scratch']
  #allocation2 [shape = 'f32[1,16,256]{2,1,0:T(8,128)}', space=vmem, size = 0x4000, scoped, tag = 'scratch operand']
  %s0 = inlined_call_operand.vmem [shape: f32[2,32,128], index: 0, kind: input, shape index: {}]
  %s1 = inlined_call_operand.vmem [shape: bf16[16,32], index: 1, kind: input, shape index: {}]
  %s2 = inlined_call_operand.vmem [shape: f32[16,1], index: 2, kind: input, shape index: {}]
  %s3 = inlined_call_operand.vmem [shape: bf16[3,16,16], index: 3, kind: input, shape index: {}]
  %s4 = inlined_call_operand.vmem [shape: f32[16,1], index: 4, kind: input, shape index: {}]
  %s5 = inlined_call_operand.vmem [shape: bf16[32,16], index: 5, kind: input, shape index: {}]
  %s6 = inlined_call_operand.vmem [shape: f32[32,1], index: 6, kind: input, shape index: {}]
  %s7 = inlined_call_operand.vmem [shape: f32[2,32,128], index: 7, kind: output, shape index: {}]
  %s8 = sld [smem:[#allocation0]]
  $region65: #{residual_block.1} parent=0
    _
  %s10 = ssub.s32 1, %s8
  %s11 = scalar_select 0, %s10, %s8
  loop: start=0, step=1, limit=4
  $region2: #{residual_block.1} parent=0 // loop_pre_header
    _
  $region3: #{residual_block.1} parent=0 // loop_header
    %s13 = sphi 0, %s17
    %p14 = scmp.ge.s32.totalorder %s13, 4
    %s20 = sphi 0, %s32
    %s21 = sphi 0, %s28
    %s22 = sphi 0, %s20
    %s23 = sphi 0, %s21
    %s24 = sphi 0, %s22
    %s25 = sphi 0, %s23
    %s37 = sphi 0, %s39
    %s40 = sphi 0, %s37
    %s41 = sphi 0, %s40
    %s57 = sphi 0, %s41
    %s61 = sphi 0, %s61
    %s63 = sphi 0, %s61
    %s64 = sphi 0, %s63
    %s78 = sphi 0, %s64
    %s82 = sphi 0, %s82
    %s84 = sphi 0, %s82
    %s85 = sphi 0, %s84
    %s99 = sphi 0, %s85
    %s103 = sphi 0, %s103
    %s105 = sphi 0, %s103
    %s106 = sphi 0, %s105
    %s120 = sphi 0, %s106
    %s124 = sphi 0, %s124
    %s126 = sphi 0, %s124
    %s127 = sphi 0, %s126
    %s141 = sphi 0, %s127
    %s145 = sphi 0, %s145
    %s147 = sphi 0, %s145
    %s148 = sphi 0, %s147
    %s162 = sphi 0, %s148
    %s166 = sphi 0, %s166
    %s168 = sphi 0, %s166
    %s169 = sphi 0, %s168
    %s183 = sphi 0, %s169
    %s191 = sphi 0, %s193
    %s194 = sphi 0, %s191
    %s195 = sphi 0, %s194
    %s211 = sphi 0, %s195
  $region4: #{residual_block.1} parent=0 // loop_header_branch
    %16 = sbr.rel (%p14) target = $region8
  $region5: #{residual_block.1} parent=0 // loop_body
    %s18 = ssub.s32 %s13, 1
    %s19 = ssub.s32 %s13, 2
    %s26 = sadd.s32 1, %s21
    %p27 = scmp.ge.s32.totalorder %s26, 1
    %s28 = scalar_select %p27, 0, %s26
    %s29 = sadd.s32 1, %s20
    %s30 = scalar_select %p27, %s29, %s20
    %p31 = scmp.ge.s32.totalorder %s30, 2
    %s32 = scalar_select %p31, 0, %s30
    %s33 = ssub.s32 %s20, %s32
    %s34 = ssub.s32 %s21, %s28
    %s35 = sor.u32 %s33, %s34
    %p36 = scmp.eq.s32.totalorder %s35, 0
    %s38 = sadd.s32 %s37, 1
    %s39 = scalar_select %p36, %s37, %s38
    %p42 = pneg %p36
    %p43 = scmp.eq.s32.totalorder %s13, 1
    %p44 = por %p42, %p43
    %p45 = scmp.ne.s32.totalorder %s37, %s40
    %p46 = scmp.eq.s32.totalorder %s13, 0
    %p47 = por %p45, %p46
    %p48 = scmp.ne.s32.totalorder %s37, %s40
    %p49 = scmp.eq.s32.totalorder %s18, 1
    %p50 = por %p48, %p49
    %p51 = scmp.ne.s32.totalorder %s40, %s41
    %p52 = scmp.eq.s32.totalorder %s18, 0
    %p53 = por %p51, %p52
    %p54 = scmp.ne.s32.totalorder %s40, %s41
    %p55 = scmp.eq.s32.totalorder %s19, 1
    %p56 = por %p54, %p55
    %p58 = scmp.ne.s32.totalorder %s41, %s57
    %p59 = scmp.eq.s32.totalorder %s19, 0
    %p60 = por %p58, %p59
    %s62 = sadd.s32 %s61, 1
    %p65 = scmp.eq.s32.totalorder %s13, 1
    %p66 = scmp.ne.s32.totalorder %s61, %s63
    %p67 = scmp.eq.s32.totalorder %s13, 0
    %p68 = por %p66, %p67
    %p69 = scmp.ne.s32.totalorder %s61, %s63
    %p70 = scmp.eq.s32.totalorder %s18, 1
    %p71 = por %p69, %p70
    %p72 = scmp.ne.s32.totalorder %s63, %s64
    %p73 = scmp.eq.s32.totalorder %s18, 0
    %p74 = por %p72, %p73
    %p75 = scmp.ne.s32.totalorder %s63, %s64
    %p76 = scmp.eq.s32.totalorder %s19, 1
    %p77 = por %p75, %p76
    %p79 = scmp.ne.s32.totalorder %s64, %s78
    %p80 = scmp.eq.s32.totalorder %s19, 0
    %p81 = por %p79, %p80
    %s83 = sadd.s32 %s82, 1
    %p86 = scmp.eq.s32.totalorder %s13, 1
    %p87 = scmp.ne.s32.totalorder %s82, %s84
    %p88 = scmp.eq.s32.totalorder %s13, 0
    %p89 = por %p87, %p88
    %p90 = scmp.ne.s32.totalorder %s82, %s84
    %p91 = scmp.eq.s32.totalorder %s18, 1
    %p92 = por %p90, %p91
    %p93 = scmp.ne.s32.totalorder %s84, %s85
    %p94 = scmp.eq.s32.totalorder %s18, 0
    %p95 = por %p93, %p94
    %p96 = scmp.ne.s32.totalorder %s84, %s85
    %p97 = scmp.eq.s32.totalorder %s19, 1
    %p98 = por %p96, %p97
    %p100 = scmp.ne.s32.totalorder %s85, %s99
    %p101 = scmp.eq.s32.totalorder %s19, 0
    %p102 = por %p100, %p101
    %s104 = sadd.s32 %s103, 1
    %p107 = scmp.eq.s32.totalorder %s13, 1
    %p108 = scmp.ne.s32.totalorder %s103, %s105
    %p109 = scmp.eq.s32.totalorder %s13, 0
    %p110 = por %p108, %p109
    %p111 = scmp.ne.s32.totalorder %s103, %s105
    %p112 = scmp.eq.s32.totalorder %s18, 1
    %p113 = por %p111, %p112
    %p114 = scmp.ne.s32.totalorder %s105, %s106
    %p115 = scmp.eq.s32.totalorder %s18, 0
    %p116 = por %p114, %p115
    %p117 = scmp.ne.s32.totalorder %s105, %s106
    %p118 = scmp.eq.s32.totalorder %s19, 1
    %p119 = por %p117, %p118
    %p121 = scmp.ne.s32.totalorder %s106, %s120
    %p122 = scmp.eq.s32.totalorder %s19, 0
    %p123 = por %p121, %p122
    %s125 = sadd.s32 %s124, 1
    %p128 = scmp.eq.s32.totalorder %s13, 1
    %p129 = scmp.ne.s32.totalorder %s124, %s126
    %p130 = scmp.eq.s32.totalorder %s13, 0
    %p131 = por %p129, %p130
    %p132 = scmp.ne.s32.totalorder %s124, %s126
    %p133 = scmp.eq.s32.totalorder %s18, 1
    %p134 = por %p132, %p133
    %p135 = scmp.ne.s32.totalorder %s126, %s127
    %p136 = scmp.eq.s32.totalorder %s18, 0
    %p137 = por %p135, %p136
    %p138 = scmp.ne.s32.totalorder %s126, %s127
    %p139 = scmp.eq.s32.totalorder %s19, 1
    %p140 = por %p138, %p139
    %p142 = scmp.ne.s32.totalorder %s127, %s141
    %p143 = scmp.eq.s32.totalorder %s19, 0
    %p144 = por %p142, %p143
    %s146 = sadd.s32 %s145, 1
    %p149 = scmp.eq.s32.totalorder %s13, 1
    %p150 = scmp.ne.s32.totalorder %s145, %s147
    %p151 = scmp.eq.s32.totalorder %s13, 0
    %p152 = por %p150, %p151
    %p153 = scmp.ne.s32.totalorder %s145, %s147
    %p154 = scmp.eq.s32.totalorder %s18, 1
    %p155 = por %p153, %p154
    %p156 = scmp.ne.s32.totalorder %s147, %s148
    %p157 = scmp.eq.s32.totalorder %s18, 0
    %p158 = por %p156, %p157
    %p159 = scmp.ne.s32.totalorder %s147, %s148
    %p160 = scmp.eq.s32.totalorder %s19, 1
    %p161 = por %p159, %p160
    %p163 = scmp.ne.s32.totalorder %s148, %s162
    %p164 = scmp.eq.s32.totalorder %s19, 0
    %p165 = por %p163, %p164
    %s167 = sadd.s32 %s166, 1
    %p170 = scmp.eq.s32.totalorder %s13, 1
    %p171 = scmp.ne.s32.totalorder %s166, %s168
    %p172 = scmp.eq.s32.totalorder %s13, 0
    %p173 = por %p171, %p172
    %p174 = scmp.ne.s32.totalorder %s166, %s168
    %p175 = scmp.eq.s32.totalorder %s18, 1
    %p176 = por %p174, %p175
    %p177 = scmp.ne.s32.totalorder %s168, %s169
    %p178 = scmp.eq.s32.totalorder %s18, 0
    %p179 = por %p177, %p178
    %p180 = scmp.ne.s32.totalorder %s168, %s169
    %p181 = scmp.eq.s32.totalorder %s19, 1
    %p182 = por %p180, %p181
    %p184 = scmp.ne.s32.totalorder %s169, %s183
    %p185 = scmp.eq.s32.totalorder %s19, 0
    %p186 = por %p184, %p185
    %s187 = ssub.s32 %s20, %s32
    %s188 = ssub.s32 %s21, %s28
    %s189 = sor.u32 %s187, %s188
    %p190 = scmp.eq.s32.totalorder %s189, 0
    %s192 = sadd.s32 %s191, 1
    %s193 = scalar_select %p190, %s191, %s192
    %p196 = pneg %p190
    %p197 = scmp.eq.s32.totalorder %s13, 1
    %p198 = por %p196, %p197
    %p199 = scmp.ne.s32.totalorder %s191, %s194
    %p200 = scmp.eq.s32.totalorder %s13, 0
    %p201 = por %p199, %p200
    %p202 = scmp.ne.s32.totalorder %s191, %s194
    %p203 = scmp.eq.s32.totalorder %s18, 1
    %p204 = por %p202, %p203
    %p205 = scmp.ne.s32.totalorder %s194, %s195
    %p206 = scmp.eq.s32.totalorder %s18, 0
    %p207 = por %p205, %p206
    %p208 = scmp.ne.s32.totalorder %s194, %s195
    %p209 = scmp.eq.s32.totalorder %s19, 1
    %p210 = por %p208, %p209
    %p212 = scmp.ne.s32.totalorder %s195, %s211
    %p213 = scmp.eq.s32.totalorder %s19, 0
    %p214 = por %p212, %p213
    %p215 = scmp.le.s32.totalorder 1, %s13
    %p216 = scmp.lt.s32.totalorder %s13, 3
    %p217 = pnand %p215, %p216
    %p218 = pneg %p217
    // Predicated region
    $region9: #{residual_block.1} parent=5 // pred_check
      _
    $region10: #{residual_block.1} parent=5 // pred_check_branch
      %220 = sbr.rel (%p217) target = $region12
    $region11: #{residual_block.1} parent=5 // pred_region
      %s221 = ssub.s32 %s13, 1
      // Predicated region
      $region13: #{residual_block.1} parent=11 // pred_check
        %p222 = pneg %p74
      $region14: #{residual_block.1} parent=11 // pred_check_branch
        %224 = sbr.rel (%p222) target = $region16
      $region15: #{residual_block.1} parent=11 // pred_region
        _
      $region16: #{residual_block.1} parent=11 // pred_fallthru
        _
      // Predicated region
      $region17: #{residual_block.1} parent=11 // pred_check
        %p225 = pneg %p95
      $region18: #{residual_block.1} parent=11 // pred_check_branch
        %227 = sbr.rel (%p225) target = $region20
      $region19: #{residual_block.1} parent=11 // pred_region
        _
      $region20: #{residual_block.1} parent=11 // pred_fallthru
        _
      // Predicated region
      $region21: #{residual_block.1} parent=11 // pred_check
        %p228 = pneg %p116
      $region22: #{residual_block.1} parent=11 // pred_check_branch
        %230 = sbr.rel (%p228) target = $region24
      $region23: #{residual_block.1} parent=11 // pred_region
        _
      $region24: #{residual_block.1} parent=11 // pred_fallthru
        _
      // Predicated region
      $region25: #{residual_block.1} parent=11 // pred_check
        %p231 = pneg %p137
      $region26: #{residual_block.1} parent=11 // pred_check_branch
        %233 = sbr.rel (%p231) target = $region28
      $region27: #{residual_block.1} parent=11 // pred_region
        _
      $region28: #{residual_block.1} parent=11 // pred_fallthru
        _
      // Predicated region
      $region29: #{residual_block.1} parent=11 // pred_check
        %p234 = pneg %p158
      $region30: #{residual_block.1} parent=11 // pred_check_branch
        %236 = sbr.rel (%p234) target = $region32
      $region31: #{residual_block.1} parent=11 // pred_region
        _
      $region32: #{residual_block.1} parent=11 // pred_fallthru
        _
      // Predicated region
      $region33: #{residual_block.1} parent=11 // pred_check
        %p237 = pneg %p179
      $region34: #{residual_block.1} parent=11 // pred_check_branch
        %239 = sbr.rel (%p237) target = $region36
      $region35: #{residual_block.1} parent=11 // pred_region
        _
      $region36: #{residual_block.1} parent=11 // pred_fallthru
        _
    $region12: #{residual_block.1} parent=5 // pred_fallthru
      _
    %p240 = scmp.lt.s32.totalorder %s13, 2
    // Predicated region
    $region37: #{residual_block.1} parent=5 // pred_check
      %p241 = pneg %p240
    $region38: #{residual_block.1} parent=5 // pred_check_branch
      %243 = sbr.rel (%p241) target = $region40
    $region39: #{residual_block.1} parent=5 // pred_region
      // Predicated region
      $region41: #{residual_block.1} parent=39 // pred_check
        %p244 = pneg %p47
      $region42: #{residual_block.1} parent=39 // pred_check_branch
        %246 = sbr.rel (%p244) target = $region44
      $region43: #{residual_block.1} parent=39 // pred_region
        %p247 = scmp.lt.s32.totalorder %s20, 1
        %s248 = scalar_select %p247, %s20, 1
        %p249 = scmp.lt.s32.totalorder %s21, 0
        %s250 = scalar_select %p249, %s21, 0
        %s251 = smul.addr %s248, 4
        %s252 = sadd.s32 %s250, %s251
        %s253 = smul.addr %s252, 8
        %s254 = scalar_lea.vmem %s0, %s253
      $region44: #{residual_block.1} parent=39 // pred_fallthru
        _
    $region40: #{residual_block.1} parent=5 // pred_fallthru
      _
    %p255 = scmp.le.s32.totalorder 1, %s13
    %p256 = scmp.lt.s32.totalorder %s13, 3
    %p257 = pnand %p255, %p256
    %p258 = pneg %p257
    // Predicated region
    $region45: #{residual_block.1} parent=5 // pred_check
      _
    $region46: #{residual_block.1} parent=5 // pred_check_branch
      %260 = sbr.rel (%p257) target = $region48
    $region47: #{residual_block.1} parent=5 // pred_region
      %s261 = ssub.s32 %s13, 1
      %p262 = scmp.lt.s32.totalorder %s22, 1
      %s263 = scalar_select %p262, %s22, 1
      %p264 = scmp.lt.s32.totalorder %s23, 0
      %s265 = scalar_select %p264, %s23, 0
      %s266 = smul.addr %s263, 4
      %s267 = sadd.s32 %s265, %s266
      %s268 = smul.addr %s267, 8
      %s269 = scalar_lea.vmem %s0, %s268
      %p270 = pneg %p53
      %p271 = pneg %p50
      %p272 = pneg %p74
      %p273 = pneg %p71
      %p274 = pneg %p95
      %p275 = pneg %p92
      %p276 = pneg %p116
      %p277 = pneg %p113
      %p278 = pneg %p137
      %p279 = pneg %p134
      %p280 = pneg %p158
      %p281 = pneg %p155
      %p282 = pneg %p179
      %p283 = pneg %p176
      %p284 = pneg %p207
      %p285 = pneg %p204
      %p286 = scmp.lt.s32.totalorder %s22, 1
      %s287 = scalar_select %p286, %s22, 1
      %p288 = scmp.lt.s32.totalorder %s23, 0
      %s289 = scalar_select %p288, %s23, 0
      %s290 = smul.addr %s287, 4
      %s291 = sadd.s32 %s289, %s290
      %s292 = smul.addr %s291, 8
      %s293 = scalar_lea.vmem %s7, %s292
      %p294 = scmp.lt.s32.totalorder %s22, 1
      %s295 = scalar_select %p294, %s22, 1
      %p296 = scmp.lt.s32.totalorder %s23, 0
      %s297 = scalar_select %p296, %s23, 0
      %s298 = smul.addr %s295, 4
      %s299 = sadd.s32 %s297, %s298
      %s300 = smul.addr %s299, 8
      %s301 = scalar_lea.vmem %s0, %s300
      %p302 = scmp.lt.s32.totalorder %s22, 1
      %s303 = scalar_select %p302, %s22, 1
      %p304 = scmp.lt.s32.totalorder %s23, 0
      %s305 = scalar_select %p304, %s23, 0
      %s306 = smul.addr %s303, 4
      %s307 = sadd.s32 %s305, %s306
      %s308 = smul.addr %s307, 8
      %s309 = scalar_lea.vmem %s7, %s308
      %v311 = vld [vmem:[%s1] sm:$0xf]
      %v312 = vld [vmem:[%s1 + $0x4] sm:$0xf]
      %v313 = vld [vmem:[%s3] sm:$0xf]
      %v314 = vld [vmem:[%s3 + $0x4] sm:$0xf]
      %s315 = scalar_lea.vmem %s3, 8
      %v316 = vld [vmem:[%s315] sm:$0xf]
      %v317 = vld [vmem:[%s315 + $0x4] sm:$0xf]
      %s318 = scalar_lea.vmem %s3, 16
      %v319 = vld [vmem:[%s318] sm:$0xf]
      %v320 = vld [vmem:[%s318 + $0x4] sm:$0xf]
      %v321 = vld [vmem:[%s5] sm:$0xf]
      %v322 = vld [vmem:[%s5 + $0x4] sm:$0xf]
      %v323 = vld [vmem:[%s5 + $0x8] sm:$0xf]
      %v324 = vld [vmem:[%s5 + $0xc] sm:$0xf]
      %v325 = vld [vmem:[%s2] sm:$0xff]
      %v326 = vld [vmem:[%s2 + $0x8] sm:$0xff]
      %v327 = vld [vmem:[%s4] sm:$0xff]
      %v328 = vld [vmem:[%s4 + $0x8] sm:$0xff]
      %v329 = vld [vmem:[%s6] sm:$0xff]
      %v330 = vld [vmem:[%s6 + $0x8] sm:$0xff]
      %v331 = vld [vmem:[%s6 + $0x10] sm:$0xff]
      %v332 = vld [vmem:[%s6 + $0x18] sm:$0xff]
      %p333 = scmp.eq.s32.totalorder %s23, 0
      // Predicated region
      $region49: #{residual_block.1} parent=47 // pred_check
        %p334 = pneg %p333
      $region50: #{residual_block.1} parent=47 // pred_check_branch
        %336 = sbr.rel (%p334) target = $region52
      $region51: #{residual_block.1} parent=47 // pred_region
        %337 = vst [vmem:[#allocation2] sm:$0xff] 0.0
        %338 = vst [vmem:[#allocation2 + $0x10] sm:$0xff] 0.0
      $region52: #{residual_block.1} parent=47 // pred_fallthru
        _
      %v339 = vld [vmem:[%s301] sm:$0xff]
      %v340 = vld [vmem:[%s301 + $0x8] sm:$0xff]
      %v341 = vld [vmem:[%s301 + $0x10] sm:$0xff]
      %v342 = vld [vmem:[%s301 + $0x18] sm:$0xff]
      %v343 = vpack.c.bf16 %v340, %v339
      %v344 = vpack.c.bf16 %v342, %v341
      %346 = vset.pattern.permute.xlu0 0
      %347 = vperm.xlu0 %346, %v325
      %v348 = vpop.permute.xlu0 %347
      %351 = vset.pattern.permute.xlu0 0
      %352 = vperm.xlu0 %351, %v326
      %v353 = vpop.permute.xlu0 %352
      %v357 = vunpack.c.l.b16 %v311
      %v358 = vunpack.c.l.b16 %v312
      %v359 = vpack.c.b16 %v358, %v357
      %vm360 = vcmask 261120
      %v362 = vsel %vm360, %v359, 0
      %364 = vmatprep.subr.bf16.mxu0 0
      %365 = vmatpush1.bf16.msra.mxu0 0
      %366 = vmatprep.subr.bf16.mxu0 0
      %367 = vmatpush1.bf16.msra.mxu0 0
      %368 = vmatprep.subr.bf16.mxu0 0
      %369 = vmatpush1.bf16.msra.mxu0 0
      %370 = vmatprep.subr.bf16.mxu0 0
      %371 = vmatpush1.bf16.msra.mxu0 0
      %372 = vmatprep.subr.bf16.mxu0 0
      %373 = vmatpush1.bf16.msra.mxu0 0
      %374 = vmatprep.subr.bf16.mxu0 0
      %375 = vmatpush1.bf16.msra.mxu0 0
      %376 = vmatprep.subr.bf16.mxu0 0
      %377 = vmatpush1.bf16.msra.mxu0 %v344
      %378 = vmatprep.subr.bf16.mxu0 0
      %379 = vmatpush1.bf16.msra.mxu0 %v343
      %380 = vmatprep.subr.bf16.mxu0 0
      %381 = vmatpush2.bf16.msra.mxu0 0
      %382 = vmatprep.subr.bf16.mxu0 0
      %383 = vmatpush2.bf16.msra.mxu0 0
      %384 = vmatprep.subr.bf16.mxu0 0
      %385 = vmatpush2.bf16.msra.mxu0 0
      %386 = vmatprep.subr.bf16.mxu0 0
      %387 = vmatpush2.bf16.msra.mxu0 0
      %388 = vmatprep.subr.bf16.mxu0 0
      %389 = vmatpush2.bf16.msra.mxu0 0
      %390 = vmatprep.subr.bf16.mxu0 0
      %391 = vmatpush2.bf16.msra.mxu0 0
      %392 = vmatprep.subr.bf16.mxu0 0
      %393 = vmatpush2.bf16.msra.mxu0 0
      %394 = vmatprep.subr.bf16.mxu0 0
      %395 = vmatpush2.bf16.msra.mxu0 0
      %396 = vmatprep.mubr.bf16.mxu0 0
      %397 = vmatmul.mubr.bf16.gmra.mxu0 %v362
      %v398 = vpop.f32.mrf.mxu0
      %v399 = vadd.f32 %v348, %v398
      %v400 = vpop.f32.mrf.mxu0
      %v401 = vpop.f32.mrf.mxu0
      %v402 = vadd.f32 %v353, %v401
      %v403 = vpop.f32.mrf.mxu0
      %404 = vdwg.mxu0
      %v405 = vmax.f32 %v399, 0.0
      %v406 = vmax.f32 %v402, 0.0
      %407 = vst [vmem:[#allocation2 + $0x8] sm:$0xff] %v405
      %408 = vst [vmem:[#allocation2 + $0x18] sm:$0xff] %v406
      %v409 = vld [vmem:[#allocation2] sm:$0xff]
      %v410 = vld [vmem:[#allocation2 + $0x8] sm:$0xff]
      %v411 = vld [vmem:[#allocation2 + $0x10] sm:$0xff]
      %v412 = vld [vmem:[#allocation2 + $0x18] sm:$0xff]
      %v413 = vpack.c.bf16 %v411, %v409
      %v414 = vpack.c.bf16 %v412, %v410
      %v417 = vunpack.c.l.b16 %v316
      %v418 = vunpack.c.l.b16 %v317
      %v419 = vpack.c.b16 %v418, %v417
      %422 = vrot.lane.b32.xlu0 %v413, 2
      %v423 = vpop.permute.xlu0 %422
      %424 = vrot.lane.b32.xlu0 %v414, 2
      %v425 = vpop.permute.xlu0 %424
      %vm426 = vcmask 15360
      %v427 = vsel %vm426, %v423, %v425
      %vm429 = vcmask 130048
      %v431 = vsel %vm429, %v419, 0
      %433 = vmatprep.subr.bf16.mxu0 0
      %434 = vmatpush1.bf16.msra.mxu0 0
      %435 = vmatprep.subr.bf16.mxu0 0
      %436 = vmatpush1.bf16.msra.mxu0 0
      %437 = vmatprep.subr.bf16.mxu0 0
      %438 = vmatpush1.bf16.msra.mxu0 0
      %439 = vmatprep.subr.bf16.mxu0 0
      %440 = vmatpush1.bf16.msra.mxu0 0
      %441 = vmatprep.subr.bf16.mxu0 0
      %442 = vmatpush1.bf16.msra.mxu0 0
      %443 = vmatprep.subr.bf16.mxu0 0
      %444 = vmatpush1.bf16.msra.mxu0 0
      %445 = vmatprep.subr.bf16.mxu0 0
      %446 = vmatpush1.bf16.msra.mxu0 0
      %447 = vmatprep.subr.bf16.mxu0 0
      %448 = vmatpush1.bf16.msra.mxu0 %v427
      %449 = vmatprep.subr.bf16.mxu0 0
      %450 = vmatpush2.bf16.msra.mxu0 0
      %451 = vmatprep.subr.bf16.mxu0 0
      %452 = vmatpush2.bf16.msra.mxu0 0
      %453 = vmatprep.subr.bf16.mxu0 0
      %454 = vmatpush2.bf16.msra.mxu0 0
      %455 = vmatprep.subr.bf16.mxu0 0
      %456 = vmatpush2.bf16.msra.mxu0 0
      %457 = vmatprep.subr.bf16.mxu0 0
      %458 = vmatpush2.bf16.msra.mxu0 0
      %459 = vmatprep.subr.bf16.mxu0 0
      %460 = vmatpush2.bf16.msra.mxu0 0
      %461 = vmatprep.subr.bf16.mxu0 0
      %462 = vmatpush2.bf16.msra.mxu0 0
      %463 = vmatprep.subr.bf16.mxu0 0
      %464 = vmatpush2.bf16.msra.mxu0 0
      %465 = vmatprep.mubr.bf16.mxu0 0
      %466 = vmatmul.mubr.bf16.gmra.mxu0 %v431
      %v467 = vpop.f32.mrf.mxu0
      %v468 = vadd.f32 0.0, %v467
      %v469 = vpop.f32.mrf.mxu0
      %v470 = vpop.f32.mrf.mxu0
      %v471 = vadd.f32 0.0, %v470
      %v472 = vpop.f32.mrf.mxu0
      %473 = vdwg.mxu0
      %v476 = vunpack.c.l.b16 %v313
      %v477 = vunpack.c.l.b16 %v314
      %v478 = vpack.c.b16 %v477, %v476
      %479 = vrot.lane.b32.xlu0 %v413, 4
      %v480 = vpop.permute.xlu0 %479
      %481 = vrot.lane.b32.xlu0 %v414, 4
      %v482 = vpop.permute.xlu0 %481
      %vm483 = vcmask 31744
      %v484 = vsel %vm483, %v480, %v482
      %v487 = vsel %vm429, %v478, 0
      %489 = vmatprep.subr.bf16.mxu0 0
      %490 = vmatpush1.bf16.msra.mxu0 0
      %491 = vmatprep.subr.bf16.mxu0 0
      %492 = vmatpush1.bf16.msra.mxu0 0
      %493 = vmatprep.subr.bf16.mxu0 0
      %494 = vmatpush1.bf16.msra.mxu0 0
      %495 = vmatprep.subr.bf16.mxu0 0
      %496 = vmatpush1.bf16.msra.mxu0 0
      %497 = vmatprep.subr.bf16.mxu0 0
      %498 = vmatpush1.bf16.msra.mxu0 0
      %499 = vmatprep.subr.bf16.mxu0 0
      %500 = vmatpush1.bf16.msra.mxu0 0
      %501 = vmatprep.subr.bf16.mxu0 0
      %502 = vmatpush1.bf16.msra.mxu0 0
      %503 = vmatprep.subr.bf16.mxu0 0
      %504 = vmatpush1.bf16.msra.mxu0 %v484
      %505 = vmatprep.subr.bf16.mxu0 0
      %506 = vmatpush2.bf16.msra.mxu0 0
      %507 = vmatprep.subr.bf16.mxu0 0
      %508 = vmatpush2.bf16.msra.mxu0 0
      %509 = vmatprep.subr.bf16.mxu0 0
      %510 = vmatpush2.bf16.msra.mxu0 0
      %511 = vmatprep.subr.bf16.mxu0 0
      %512 = vmatpush2.bf16.msra.mxu0 0
      %513 = vmatprep.subr.bf16.mxu0 0
      %514 = vmatpush2.bf16.msra.mxu0 0
      %515 = vmatprep.subr.bf16.mxu0 0
      %516 = vmatpush2.bf16.msra.mxu0 0
      %517 = vmatprep.subr.bf16.mxu0 0
      %518 = vmatpush2.bf16.msra.mxu0 0
      %519 = vmatprep.subr.bf16.mxu0 0
      %520 = vmatpush2.bf16.msra.mxu0 0
      %521 = vmatprep.mubr.bf16.mxu0 0
      %522 = vmatmul.mubr.bf16.gmra.mxu0 %v487
      %v523 = vpop.f32.mrf.mxu0
      %v524 = vadd.f32 %v468, %v523
      %v525 = vpop.f32.mrf.mxu0
      %v526 = vpop.f32.mrf.mxu0
      %v527 = vadd.f32 %v471, %v526
      %v528 = vpop.f32.mrf.mxu0
      %529 = vdwg.mxu0
      %v532 = vunpack.c.l.b16 %v319
      %v533 = vunpack.c.l.b16 %v320
      %v534 = vpack.c.b16 %v533, %v532
      %v536 = vsel %vm429, %v534, 0
      %538 = vmatprep.subr.bf16.mxu0 0
      %539 = vmatpush1.bf16.msra.mxu0 0
      %540 = vmatprep.subr.bf16.mxu0 0
      %541 = vmatpush1.bf16.msra.mxu0 0
      %542 = vmatprep.subr.bf16.mxu0 0
      %543 = vmatpush1.bf16.msra.mxu0 0
      %544 = vmatprep.subr.bf16.mxu0 0
      %545 = vmatpush1.bf16.msra.mxu0 0
      %546 = vmatprep.subr.bf16.mxu0 0
      %547 = vmatpush1.bf16.msra.mxu0 0
      %548 = vmatprep.subr.bf16.mxu0 0
      %549 = vmatpush1.bf16.msra.mxu0 0
      %550 = vmatprep.subr.bf16.mxu0 0
      %551 = vmatpush1.bf16.msra.mxu0 0
      %552 = vmatprep.subr.bf16.mxu0 0
      %553 = vmatpush1.bf16.msra.mxu0 %v414
      %554 = vmatprep.subr.bf16.mxu0 0
      %555 = vmatpush2.bf16.msra.mxu0 0
      %556 = vmatprep.subr.bf16.mxu0 0
      %557 = vmatpush2.bf16.msra.mxu0 0
      %558 = vmatprep.subr.bf16.mxu0 0
      %559 = vmatpush2.bf16.msra.mxu0 0
      %560 = vmatprep.subr.bf16.mxu0 0
      %561 = vmatpush2.bf16.msra.mxu0 0
      %562 = vmatprep.subr.bf16.mxu0 0
      %563 = vmatpush2.bf16.msra.mxu0 0
      %564 = vmatprep.subr.bf16.mxu0 0
      %565 = vmatpush2.bf16.msra.mxu0 0
      %566 = vmatprep.subr.bf16.mxu0 0
      %567 = vmatpush2.bf16.msra.mxu0 0
      %568 = vmatprep.subr.bf16.mxu0 0
      %569 = vmatpush2.bf16.msra.mxu0 0
      %570 = vmatprep.mubr.bf16.mxu0 0
      %571 = vmatmul.mubr.bf16.gmra.mxu0 %v536
      %v572 = vpop.f32.mrf.mxu0
      %v573 = vadd.f32 0.0, %v572
      %v574 = vpop.f32.mrf.mxu0
      %v575 = vpop.f32.mrf.mxu0
      %v576 = vadd.f32 0.0, %v575
      %v577 = vpop.f32.mrf.mxu0
      %578 = vdwg.mxu0
      %v579 = vadd.f32 %v524, %v573
      %v580 = vadd.f32 %v527, %v576
      %vm581 = vcmask 1048544
      %582 = vst.msk [vmem:[#allocation2] sm:$0xff] %vm581, %v405
      %583 = vst.msk [vmem:[#allocation2 + $0x10] sm:$0xff] %vm581, %v406
      %585 = vset.pattern.permute.xlu0 0
      %586 = vperm.xlu0 %585, %v327
      %v587 = vpop.permute.xlu0 %586
      %590 = vset.pattern.permute.xlu0 0
      %591 = vperm.xlu0 %590, %v328
      %v592 = vpop.permute.xlu0 %591
      %v594 = vadd.f32 %v579, %v587
      %v595 = vadd.f32 %v580, %v592
      %v596 = vmax.f32 %v594, 0.0
      %v597 = vmax.f32 %v595, 0.0
      %v598 = vpack.c.bf16 %v597, %v596
      %600 = vset.pattern.permute.xlu0 0
      %601 = vperm.xlu0 %600, %v329
      %v602 = vpop.permute.xlu0 %601
      %605 = vset.pattern.permute.xlu0 0
      %606 = vperm.xlu0 %605, %v330
      %v607 = vpop.permute.xlu0 %606
      %610 = vset.pattern.permute.xlu0 0
      %611 = vperm.xlu0 %610, %v331
      %v612 = vpop.permute.xlu0 %611
      %615 = vset.pattern.permute.xlu0 0
      %616 = vperm.xlu0 %615, %v332
      %v617 = vpop.permute.xlu0 %616
      %v623 = vunpack.c.l.b16 %v321
      %v624 = vunpack.c.l.b16 %v322
      %v625 = vunpack.c.l.b16 %v323
      %v626 = vunpack.c.l.b16 %v324
      %v627 = vpack.c.b16 %v624, %v623
      %v628 = vpack.c.b16 %v626, %v625
      %v630 = vsel %vm429, %v627, 0
      %v633 = vsel %vm429, %v628, 0
      %635 = vmatprep.subr.bf16.mxu0 0
      %636 = vmatpush1.bf16.msra.mxu0 0
      %637 = vmatprep.subr.bf16.mxu0 0
      %638 = vmatpush1.bf16.msra.mxu0 0
      %639 = vmatprep.subr.bf16.mxu0 0
      %640 = vmatpush1.bf16.msra.mxu0 0
      %641 = vmatprep.subr.bf16.mxu0 0
      %642 = vmatpush1.bf16.msra.mxu0 0
      %643 = vmatprep.subr.bf16.mxu0 0
      %644 = vmatpush1.bf16.msra.mxu0 0
      %645 = vmatprep.subr.bf16.mxu0 0
      %646 = vmatpush1.bf16.msra.mxu0 0
      %647 = vmatprep.subr.bf16.mxu0 0
      %648 = vmatpush1.bf16.msra.mxu0 0
      %649 = vmatprep.subr.bf16.mxu0 0
      %650 = vmatpush1.bf16.msra.mxu0 %v598
      %651 = vmatprep.subr.bf16.mxu0 0
      %652 = vmatpush2.bf16.msra.mxu0 0
      %653 = vmatprep.subr.bf16.mxu0 0
      %654 = vmatpush2.bf16.msra.mxu0 0
      %655 = vmatprep.subr.bf16.mxu0 0
      %656 = vmatpush2.bf16.msra.mxu0 0
      %657 = vmatprep.subr.bf16.mxu0 0
      %658 = vmatpush2.bf16.msra.mxu0 0
      %659 = vmatprep.subr.bf16.mxu0 0
      %660 = vmatpush2.bf16.msra.mxu0 0
      %661 = vmatprep.subr.bf16.mxu0 0
      %662 = vmatpush2.bf16.msra.mxu0 0
      %663 = vmatprep.subr.bf16.mxu0 0
      %664 = vmatpush2.bf16.msra.mxu0 0
      %665 = vmatprep.subr.bf16.mxu0 0
      %666 = vmatpush2.bf16.msra.mxu0 0
      %667 = vmatprep.mubr.bf16.mxu0 0
      %668 = vmatmul.mubr.bf16.gmra.mxu0 %v630
      %v669 = vpop.f32.mrf.mxu0
      %v670 = vadd.f32 %v602, %v669
      %v671 = vpop.f32.mrf.mxu0
      %v672 = vpop.f32.mrf.mxu0
      %v673 = vadd.f32 %v607, %v672
      %v674 = vpop.f32.mrf.mxu0
      %675 = vmatprep.mubr.bf16.mxu0 0
      %676 = vmatmul.mubr.bf16.gmra.mxu0 %v633
      %v677 = vpop.f32.mrf.mxu0
      %v678 = vadd.f32 %v612, %v677
      %v679 = vpop.f32.mrf.mxu0
      %v680 = vpop.f32.mrf.mxu0
      %v681 = vadd.f32 %v617, %v680
      %v682 = vpop.f32.mrf.mxu0
      %683 = vdwg.mxu0
      %v684 = vadd.f32 %v339, %v670
      %v685 = vadd.f32 %v340, %v673
      %v686 = vadd.f32 %v341, %v678
      %v687 = vadd.f32 %v342, %v681
      %v688 = vmax.f32 %v684, 0.0
      %v689 = vmax.f32 %v685, 0.0
      %v690 = vmax.f32 %v686, 0.0
      %v691 = vmax.f32 %v687, 0.0
      %692 = vst [vmem:[%s309] sm:$0xff] %v688
      %693 = vst [vmem:[%s309 + $0x8] sm:$0xff] %v689
      %694 = vst [vmem:[%s309 + $0x10] sm:$0xff] %v690
      %695 = vst [vmem:[%s309 + $0x18] sm:$0xff] %v691
      %p696 = scmp.lt.s32.totalorder %s22, 1
      %s697 = scalar_select %p696, %s22, 1
      %p698 = scmp.lt.s32.totalorder %s23, 0
      %s699 = scalar_select %p698, %s23, 0
      %s700 = smul.addr %s697, 4
      %s701 = sadd.s32 %s699, %s700
      %s702 = smul.addr %s701, 8
      %s703 = scalar_lea.vmem %s7, %s702
      // Predicated region
      $region53: #{residual_block.1} parent=47 // pred_check
        %p704 = pneg %p204
      $region54: #{residual_block.1} parent=47 // pred_check_branch
        %706 = sbr.rel (%p704) target = $region56
      $region55: #{residual_block.1} parent=47 // pred_region
        _
      $region56: #{residual_block.1} parent=47 // pred_fallthru
        _
    $region48: #{residual_block.1} parent=5 // pred_fallthru
      _
    %p707 = scmp.le.s32.totalorder 2, %s13
    // Predicated region
    $region57: #{residual_block.1} parent=5 // pred_check
      %p708 = pneg %p707
    $region58: #{residual_block.1} parent=5 // pred_check_branch
      %710 = sbr.rel (%p708) target = $region60
    $region59: #{residual_block.1} parent=5 // pred_region
      %s711 = ssub.s32 %s13, 2
      // Predicated region
      $region61: #{residual_block.1} parent=59 // pred_check
        %p712 = pneg %p210
      $region62: #{residual_block.1} parent=59 // pred_check_branch
        %714 = sbr.rel (%p712) target = $region64
      $region63: #{residual_block.1} parent=59 // pred_region
        %p715 = scmp.lt.s32.totalorder %s24, 1
        %s716 = scalar_select %p715, %s24, 1
        %p717 = scmp.lt.s32.totalorder %s25, 0
        %s718 = scalar_select %p717, %s25, 0
        %s719 = smul.addr %s716, 4
        %s720 = sadd.s32 %s718, %s719
        %s721 = smul.addr %s720, 8
        %s722 = scalar_lea.vmem %s7, %s721
      $region64: #{residual_block.1} parent=59 // pred_fallthru
        _
    $region60: #{residual_block.1} parent=5 // pred_fallthru
      _
  $region6: #{residual_block.1} parent=0 // loop_footer
    %s17 = sadd.s32 1, %s13
  $region7: #{residual_block.1} parent=0 // loop_footer_branch
    %12 = sbr.rel target = $region3
  $region8: #{residual_block.1} parent=0 // loop_exit
    _

</llo_original>
